<compile_context>
chip_gen: v5e
topology: v5e:2x2
jax: 0.10.0
libtpu: 0.0.40
codegen_flags: <defaults>
</compile_context>

<pallas_src>
import functools

import numpy as np

import jax
import jax.numpy as jnp
from jax import lax
from jax.experimental import pallas as pl
from jax.experimental.pallas import tpu as pltpu

LANES = 128          # hidden & output dims are zero-padded to one full lane tile
SUBLANES = 8
NEG_BIG = -1e30      # bias for padded output lanes -> exp() underflows to exactly 0


def _round_up(n, m):
    return -(-n // m) * m


def vanilla_rnn_kernel(x_ref, slab_ref, out_ref, *,
                       seq_length, input_dim, r_whh, r_wph, r_bias):
    x = x_ref[...]                                         # (B, input_dim)

    # Static carve-outs of the single packed weight slab.  All block starts are
    # sublane (8)-aligned and all blocks are 128-lane dense -> zero-cost views.
    whx = slab_ref[0:input_dim, :]                         # (input_dim, 128)
    whh = slab_ref[r_whh:r_whh + LANES, :]                 # (128, 128)
    wph = slab_ref[r_wph:r_wph + LANES, :]                 # (128, 128)
    bhx = slab_ref[r_bias + 0:r_bias + 1, :]               # (1, 128)
    bhh = slab_ref[r_bias + 1:r_bias + 2, :]               # (1, 128)
    bph = slab_ref[r_bias + 2:r_bias + 3, :]               # (1, 128)

    # W_hx(x) is applied to the *same* x every step -> loop invariant.
    # Both biases are hoisted out of the recurrence as well.
    xb = jnp.dot(x, whx, preferred_element_type=jnp.float32) + (bhx + bhh)

    h0 = jnp.zeros_like(xb)                                # reference: h = 0
    # Padded hidden lanes stay exactly 0 through the recurrence (zero weight
    # columns + zero bias), so they never pollute the real lanes.

    def step(_, h):
        return jnp.tanh(xb + jnp.dot(h, whh, preferred_element_type=jnp.float32))

    h = lax.fori_loop(0, seq_length, step, h0, unroll=True)

    # Lane-dense logits: real values in lanes [0, output_dim), -1e30 elsewhere.
    logits = jnp.dot(h, wph, preferred_element_type=jnp.float32) + bph
    m = jnp.max(logits, axis=-1, keepdims=True)
    e = jnp.exp(logits - m)                                # padded lanes -> 0.0
    denom = jnp.sum(e, axis=-1, keepdims=True)
    # EUP approx reciprocal + one Newton-Raphson refinement: keeps the divide
    # off the VPU while preserving ~f32 accuracy (needed for the 1e-5 check).
    r = pl.reciprocal(denom, approx=True)
    r = r * (2.0 - denom * r)
    out_ref[...] = e * r


def pack_params(params):
    """HOST-side, one-time packing of all weights/biases into one f32 slab.

    Row layout (all matrices stored pre-transposed so the kernel does x @ W;
    every block start is a multiple of 8 sublanes):
      [0,            input_dim)         W_hx.T  zero-padded to 128 lanes
      [r_whh,        r_whh + 128)       W_hh.T  zero-padded to 128x128
      [r_wph,        r_wph + 128)       W_ph.T  zero-padded to 128x128
      r_bias + 0                        b_hx    (zero padded)
      r_bias + 1                        b_hh    (zero padded)
      r_bias + 2                        b_ph    (padded lanes = -1e30)
    """
    p = {k: np.asarray(v, np.float32) for k, v in params.items()}
    hidden_dim, input_dim = p["W_hx"].shape
    output_dim = p["W_ph"].shape[0]
    assert hidden_dim <= LANES and output_dim <= LANES, "dims must fit one lane tile"

    r_whh = _round_up(input_dim, SUBLANES)                 # sublane-aligned start
    r_wph = r_whh + LANES
    r_bias = r_wph + LANES
    rows = _round_up(r_bias + 3, SUBLANES)

    slab = np.zeros((rows, LANES), np.float32)
    slab[0:input_dim, 0:hidden_dim] = p["W_hx"].T
    slab[r_whh:r_whh + hidden_dim, 0:hidden_dim] = p["W_hh"].T
    slab[r_wph:r_wph + hidden_dim, 0:output_dim] = p["W_ph"].T
    slab[r_bias + 0, 0:hidden_dim] = p["b_hx"]
    slab[r_bias + 1, 0:hidden_dim] = p["b_hh"]
    slab[r_bias + 2, :] = NEG_BIG                          # mask padded logits
    slab[r_bias + 2, 0:output_dim] = p["b_ph"]

    meta = dict(input_dim=input_dim, r_whh=r_whh, r_wph=r_wph, r_bias=r_bias)
    return jnp.asarray(slab), meta, output_dim


@functools.partial(
    jax.jit,
    static_argnames=("seq_length", "input_dim", "r_whh", "r_wph", "r_bias",
                     "output_dim"))
def vanilla_rnn_forward(x, slab, *, seq_length, input_dim, r_whh, r_wph, r_bias,
                        output_dim):
    batch = x.shape[0]
    kernel = functools.partial(
        vanilla_rnn_kernel, seq_length=seq_length, input_dim=input_dim,
        r_whh=r_whh, r_wph=r_wph, r_bias=r_bias)

    # Advisory cost hint so XLA doesn't misplace this tiny custom call.
    flops = 2 * batch * (input_dim * LANES                 # x @ W_hx
                         + seq_length * LANES * LANES      # recurrence
                         + LANES * LANES)                  # output projection
    transcendentals = batch * LANES * (seq_length + 1) + batch  # tanh + exp + rcp
    bytes_accessed = 4 * (x.size + slab.size + batch * LANES)
    cost = pl.CostEstimate(flops=flops, transcendentals=transcendentals,
                           bytes_accessed=bytes_accessed)

    out = pl.pallas_call(
        kernel,
        out_shape=jax.ShapeDtypeStruct((batch, LANES), jnp.float32),
        in_specs=[pl.BlockSpec(memory_space=pltpu.MemorySpace.VMEM),
                  pl.BlockSpec(memory_space=pltpu.MemorySpace.VMEM)],
        out_specs=pl.BlockSpec(memory_space=pltpu.MemorySpace.VMEM),
        cost_estimate=cost,
    )(x, slab)

    return out[:, :output_dim]


def _reference_forward(x, params, seq_length):
    """Pure-JAX reference mirroring the PyTorch forward."""
    h = jnp.zeros((x.shape[0], params["W_hx"].shape[0]), jnp.float32)
    x_proj = x @ params["W_hx"].T + params["b_hx"]
    for _ in range(seq_length):
        h = jnp.tanh(x_proj + h @ params["W_hh"].T + params["b_hh"])
    logits = h @ params["W_ph"].T + params["b_ph"]
    return jax.nn.softmax(logits, axis=-1)


if __name__ == "__main__":
    seq_length, input_dim, hidden_dim, output_dim, batch_size = 8, 16, 32, 10, 8

    key = jax.random.PRNGKey(0)
    keys = jax.random.split(key, 7)

    def linear_init(k, shape, fan_in):
        # Matches torch.nn.Linear's U(-1/sqrt(fan_in), 1/sqrt(fan_in)) scheme.
        bound = 1.0 / (fan_in ** 0.5)
        return jax.random.uniform(k, shape, jnp.float32, -bound, bound)

    params = {
        "W_hx": linear_init(keys[0], (hidden_dim, input_dim), input_dim),
        "b_hx": linear_init(keys[1], (hidden_dim,), input_dim),
        "W_hh": linear_init(keys[2], (hidden_dim, hidden_dim), hidden_dim),
        "b_hh": linear_init(keys[3], (hidden_dim,), hidden_dim),
        "W_ph": linear_init(keys[4], (output_dim, hidden_dim), hidden_dim),
        "b_ph": linear_init(keys[5], (output_dim,), hidden_dim),
    }
    x = jax.random.normal(keys[6], (batch_size, input_dim), jnp.float32)

    # One-time, host-side parameter packing (param-init time, not per forward).
    slab, meta, out_dim = pack_params(params)

    out = vanilla_rnn_forward(x, slab, seq_length=seq_length,
                              output_dim=out_dim, **meta)
    jax.block_until_ready(out)

    ref = _reference_forward(x, params, seq_length)
    assert out.shape == (batch_size, output_dim)
    assert jnp.allclose(out, ref, atol=1e-5, rtol=1e-5), "mismatch vs pure-JAX reference"

    print("KERNEL_OK")
</pallas_src>

<mosaic_0001>
module attributes {stable_mosaic.version = 11 : i64} {
  func.func @vanilla_rnn_kernel(%arg0: memref<8x16xf32, #tpu.memory_space<vmem>>, %arg1: memref<280x128xf32, #tpu.memory_space<vmem>>, %arg2: memref<8x128xf32, #tpu.memory_space<vmem>>) attributes {dimension_semantics = [], scalar_prefetch = 0 : i64, scratch_operands = 0 : i64, tpu.core_type = #tpu.core_type<tc>} {
    %c0 = arith.constant 0 : index
    %c0_0 = arith.constant 0 : index
    %0 = vector.load %arg0[%c0, %c0_0] : memref<8x16xf32, #tpu.memory_space<vmem>>, vector<8x16xf32>
    %c0_1 = arith.constant 0 : index
    %c0_2 = arith.constant 0 : index
    %1 = vector.load %arg1[%c0_1, %c0_2] : memref<280x128xf32, #tpu.memory_space<vmem>>, vector<16x128xf32>
    %c16 = arith.constant 16 : index
    %c0_3 = arith.constant 0 : index
    %2 = vector.load %arg1[%c16, %c0_3] : memref<280x128xf32, #tpu.memory_space<vmem>>, vector<128x128xf32>
    %c144 = arith.constant 144 : index
    %c0_4 = arith.constant 0 : index
    %3 = vector.load %arg1[%c144, %c0_4] : memref<280x128xf32, #tpu.memory_space<vmem>>, vector<128x128xf32>
    %c272 = arith.constant 272 : index
    %c0_5 = arith.constant 0 : index
    %4 = vector.load %arg1[%c272, %c0_5] : memref<280x128xf32, #tpu.memory_space<vmem>>, vector<1x128xf32>
    %c273 = arith.constant 273 : index
    %c0_6 = arith.constant 0 : index
    %5 = vector.load %arg1[%c273, %c0_6] : memref<280x128xf32, #tpu.memory_space<vmem>>, vector<1x128xf32>
    %c274 = arith.constant 274 : index
    %c0_7 = arith.constant 0 : index
    %6 = vector.load %arg1[%c274, %c0_7] : memref<280x128xf32, #tpu.memory_space<vmem>>, vector<1x128xf32>
    %cst = arith.constant dense<0.000000e+00> : vector<8x128xf32>
    %7 = tpu.matmul %0, %1, %cst {dimension_numbers = #tpu.dot_dimension_numbers<[1], [0], [0], [1], [0, 0, 1, 1], [], []>} : vector<8x16xf32>, vector<16x128xf32>, vector<8x128xf32> -> vector<8x128xf32>
    %8 = arith.addf %4, %5 : vector<1x128xf32>
    %9 = vector.broadcast %8 : vector<1x128xf32> to vector<8x128xf32>
    %10 = arith.addf %7, %9 : vector<8x128xf32>
    %cst_8 = arith.constant 0.000000e+00 : f32
    %11 = vector.broadcast %cst_8 : f32 to vector<8x128xf32>
    %c0_i32 = arith.constant 0 : i32
    %cst_9 = arith.constant dense<0.000000e+00> : vector<8x128xf32>
    %12 = tpu.matmul %11, %2, %cst_9 {dimension_numbers = #tpu.dot_dimension_numbers<[1], [0], [0], [1], [0, 0, 1, 1], [], []>} : vector<8x128xf32>, vector<128x128xf32>, vector<8x128xf32> -> vector<8x128xf32>
    %13 = arith.addf %10, %12 : vector<8x128xf32>
    %14 = math.tanh %13 : vector<8x128xf32>
    %c1_i32 = arith.constant 1 : i32
    %cst_10 = arith.constant dense<0.000000e+00> : vector<8x128xf32>
    %15 = tpu.matmul %14, %2, %cst_10 {dimension_numbers = #tpu.dot_dimension_numbers<[1], [0], [0], [1], [0, 0, 1, 1], [], []>} : vector<8x128xf32>, vector<128x128xf32>, vector<8x128xf32> -> vector<8x128xf32>
    %16 = arith.addf %10, %15 : vector<8x128xf32>
    %17 = math.tanh %16 : vector<8x128xf32>
    %c2_i32 = arith.constant 2 : i32
    %cst_11 = arith.constant dense<0.000000e+00> : vector<8x128xf32>
    %18 = tpu.matmul %17, %2, %cst_11 {dimension_numbers = #tpu.dot_dimension_numbers<[1], [0], [0], [1], [0, 0, 1, 1], [], []>} : vector<8x128xf32>, vector<128x128xf32>, vector<8x128xf32> -> vector<8x128xf32>
    %19 = arith.addf %10, %18 : vector<8x128xf32>
    %20 = math.tanh %19 : vector<8x128xf32>
    %c3_i32 = arith.constant 3 : i32
    %cst_12 = arith.constant dense<0.000000e+00> : vector<8x128xf32>
    %21 = tpu.matmul %20, %2, %cst_12 {dimension_numbers = #tpu.dot_dimension_numbers<[1], [0], [0], [1], [0, 0, 1, 1], [], []>} : vector<8x128xf32>, vector<128x128xf32>, vector<8x128xf32> -> vector<8x128xf32>
    %22 = arith.addf %10, %21 : vector<8x128xf32>
    %23 = math.tanh %22 : vector<8x128xf32>
    %c4_i32 = arith.constant 4 : i32
    %cst_13 = arith.constant dense<0.000000e+00> : vector<8x128xf32>
    %24 = tpu.matmul %23, %2, %cst_13 {dimension_numbers = #tpu.dot_dimension_numbers<[1], [0], [0], [1], [0, 0, 1, 1], [], []>} : vector<8x128xf32>, vector<128x128xf32>, vector<8x128xf32> -> vector<8x128xf32>
    %25 = arith.addf %10, %24 : vector<8x128xf32>
    %26 = math.tanh %25 : vector<8x128xf32>
    %c5_i32 = arith.constant 5 : i32
    %cst_14 = arith.constant dense<0.000000e+00> : vector<8x128xf32>
    %27 = tpu.matmul %26, %2, %cst_14 {dimension_numbers = #tpu.dot_dimension_numbers<[1], [0], [0], [1], [0, 0, 1, 1], [], []>} : vector<8x128xf32>, vector<128x128xf32>, vector<8x128xf32> -> vector<8x128xf32>
    %28 = arith.addf %10, %27 : vector<8x128xf32>
    %29 = math.tanh %28 : vector<8x128xf32>
    %c6_i32 = arith.constant 6 : i32
    %cst_15 = arith.constant dense<0.000000e+00> : vector<8x128xf32>
    %30 = tpu.matmul %29, %2, %cst_15 {dimension_numbers = #tpu.dot_dimension_numbers<[1], [0], [0], [1], [0, 0, 1, 1], [], []>} : vector<8x128xf32>, vector<128x128xf32>, vector<8x128xf32> -> vector<8x128xf32>
    %31 = arith.addf %10, %30 : vector<8x128xf32>
    %32 = math.tanh %31 : vector<8x128xf32>
    %c7_i32 = arith.constant 7 : i32
    %cst_16 = arith.constant dense<0.000000e+00> : vector<8x128xf32>
    %33 = tpu.matmul %32, %2, %cst_16 {dimension_numbers = #tpu.dot_dimension_numbers<[1], [0], [0], [1], [0, 0, 1, 1], [], []>} : vector<8x128xf32>, vector<128x128xf32>, vector<8x128xf32> -> vector<8x128xf32>
    %34 = arith.addf %10, %33 : vector<8x128xf32>
    %35 = math.tanh %34 : vector<8x128xf32>
    %cst_17 = arith.constant dense<0.000000e+00> : vector<8x128xf32>
    %36 = tpu.matmul %35, %3, %cst_17 {dimension_numbers = #tpu.dot_dimension_numbers<[1], [0], [0], [1], [0, 0, 1, 1], [], []>} : vector<8x128xf32>, vector<128x128xf32>, vector<8x128xf32> -> vector<8x128xf32>
    %37 = vector.broadcast %6 : vector<1x128xf32> to vector<8x128xf32>
    %38 = arith.addf %36, %37 : vector<8x128xf32>
    %cst_18 = arith.constant dense<0xFF800000> : vector<8xf32>
    %39 = vector.multi_reduction <maximumf>, %38, %cst_18 [1] : vector<8x128xf32> to vector<8xf32>
    %40 = vector.shape_cast %39 : vector<8xf32> to vector<8x1xf32>
    %41 = vector.broadcast %40 : vector<8x1xf32> to vector<8x128xf32>
    %42 = arith.subf %38, %41 : vector<8x128xf32>
    %43 = math.exp %42 : vector<8x128xf32>
    %cst_19 = arith.constant dense<0.000000e+00> : vector<8xf32>
    %44 = vector.multi_reduction <add>, %43, %cst_19 [1] : vector<8x128xf32> to vector<8xf32>
    %45 = vector.shape_cast %44 : vector<8xf32> to vector<8x1xf32>
    %46 = tpu.reciprocal %45 {approx = true} : vector<8x1xf32> -> vector<8x1xf32>
    %47 = arith.mulf %45, %46 : vector<8x1xf32>
    %cst_20 = arith.constant 2.000000e+00 : f32
    %48 = vector.broadcast %cst_20 : f32 to vector<8x1xf32>
    %49 = arith.subf %48, %47 : vector<8x1xf32>
    %50 = arith.mulf %46, %49 : vector<8x1xf32>
    %51 = vector.broadcast %50 : vector<8x1xf32> to vector<8x128xf32>
    %52 = arith.mulf %43, %51 : vector<8x128xf32>
    %c0_21 = arith.constant 0 : index
    %c0_22 = arith.constant 0 : index
    %53 = vector.load %arg2[%c0_21, %c0_22] : memref<8x128xf32, #tpu.memory_space<vmem>>, vector<8x128xf32>
    tpu.vector_store %arg2[%c0_21, %c0_22], %52 {strides = array<i32>} : memref<8x128xf32, #tpu.memory_space<vmem>>, vector<8x128xf32>,
    return
  }
}

</mosaic_0001>

<llo_original>
// kernel: vanilla_rnn_forward.1
$region0: #{vanilla_rnn_forward.1}
  #allocation0 [shape = 'u32[]', space=smem, size = 0x4, offset = 0x4, fixed_abs, tag = 'smem constant byte address 0x4 - core index']
  #allocation1 [shape = 'u32[72,128]{1,0:T(1,128)}', space=vmem, size = 0x9000, scoped, tag = 'internal scratch']
  %s0 = inlined_call_operand.hbm [shape: f32[8,16], index: 0, kind: input, shape index: {}]
  %s1 = inlined_call_operand.hbm [shape: f32[280,128], index: 1, kind: input, shape index: {}]
  %s2 = inlined_call_operand.hbm [shape: f32[8,128], index: 2, kind: output, shape index: {}]
  %s3 = sld [smem:[#allocation0]]
  $region26: #{vanilla_rnn_forward.1} parent=0
    _
  %s5 = ssub.s32 1, %s3
  %s6 = scalar_select 0, %s5, %s3
  $region1: #{vanilla_rnn_forward.1} parent=0
    #allocation2 [shape = 'u8[4096]{0}', space=vmem, size = 0x1000, scoped, tag = 'input window, operand 0, single buffered']
    #allocation3 [shape = 's32[1]{0}', space=sflag, size = 0x4, scoped, tag = 'scoped memory for vanilla_rnn_forward.1']
    #allocation4 [shape = 's32[1]{0}', space=sflag, size = 0x4, scoped, tag = 'scoped memory for vanilla_rnn_forward.1']
    #allocation5 [shape = 'u8[143360]{0}', space=vmem, size = 0x23000, scoped, tag = 'input window, operand 1, single buffered']
    #allocation6 [shape = 's32[1]{0}', space=sflag, size = 0x4, scoped, tag = 'scoped memory for vanilla_rnn_forward.1']
    #allocation7 [shape = 'u8[4096]{0}', space=vmem, size = 0x1000, scoped, tag = 'output window, operand 0, single buffered']
    %7 = vsyncpa [#allocation3], 0
    %8 = vsyncpa [#allocation6], 0
    %9 = vsyncpa [#allocation4], 0
    // Predicated region
    $region2: #{vanilla_rnn_forward.1} parent=1 // pred_check
      _
    $region3: #{vanilla_rnn_forward.1} parent=1 // pred_check_branch
      %11 = sbr.rel (0) target = $region5
    $region4: #{vanilla_rnn_forward.1} parent=1 // pred_region
      %13 = vsyncadd [#allocation3], 0
      %s15 = sshll.u32 %s0, 4
      %s16 = int_to_ptr.hbm [resolvable:$true] %s15
      %s17 = sshll.u32 [#allocation2], 4
      %s18 = int_to_ptr.vmem [resolvable:$true] %s17
      %20 = dma.hbm_to_vmem [thread:$0]  %s16, 128, %s18, [#allocation3]
    $region5: #{vanilla_rnn_forward.1} parent=1 // pred_fallthru
      _
    // Predicated region
    $region6: #{vanilla_rnn_forward.1} parent=1 // pred_check
      _
    $region7: #{vanilla_rnn_forward.1} parent=1 // pred_check_branch
      %22 = sbr.rel (0) target = $region9
    $region8: #{vanilla_rnn_forward.1} parent=1 // pred_region
      %24 = vsyncadd [#allocation6], 0
      %s25 = sshll.u32 %s1, 4
      %s26 = int_to_ptr.hbm [resolvable:$true] %s25
      %s27 = sshll.u32 [#allocation5], 4
      %s28 = int_to_ptr.vmem [resolvable:$true] %s27
      %33 = dma.hbm_to_vmem [thread:$0]  %s26, 4480, %s28, [#allocation6], 128, 128, 8
    $region9: #{vanilla_rnn_forward.1} parent=1 // pred_fallthru
      _
    // Predicated region
    $region10: #{vanilla_rnn_forward.1} parent=1 // pred_check
      _
    $region11: #{vanilla_rnn_forward.1} parent=1 // pred_check_branch
      %35 = sbr.rel (0) target = $region13
    $region12: #{vanilla_rnn_forward.1} parent=1 // pred_region
      %37 = dma.done [#allocation3], 128
    $region13: #{vanilla_rnn_forward.1} parent=1 // pred_fallthru
      _
    // Predicated region
    $region14: #{vanilla_rnn_forward.1} parent=1 // pred_check
      _
    $region15: #{vanilla_rnn_forward.1} parent=1 // pred_check_branch
      %39 = sbr.rel (0) target = $region17
    $region16: #{vanilla_rnn_forward.1} parent=1 // pred_region
      %41 = dma.done [#allocation6], 4480
    $region17: #{vanilla_rnn_forward.1} parent=1 // pred_fallthru
      _
    %v42 = vld [vmem:[#allocation2] sm:$0xff]
    %v43 = vld [vmem:[#allocation5] sm:$0xff]
    %v44 = vld [vmem:[#allocation5 + $0x8] sm:$0xff]
    %v45 = vld [vmem:[#allocation5 + $0x10] sm:$0xff]
    %v46 = vld [vmem:[#allocation5 + $0x18] sm:$0xff]
    %v47 = vld [vmem:[#allocation5 + $0x20] sm:$0xff]
    %v48 = vld [vmem:[#allocation5 + $0x28] sm:$0xff]
    %v49 = vld [vmem:[#allocation5 + $0x30] sm:$0xff]
    %v50 = vld [vmem:[#allocation5 + $0x38] sm:$0xff]
    %v51 = vld [vmem:[#allocation5 + $0x40] sm:$0xff]
    %v52 = vld [vmem:[#allocation5 + $0x48] sm:$0xff]
    %v53 = vld [vmem:[#allocation5 + $0x50] sm:$0xff]
    %v54 = vld [vmem:[#allocation5 + $0x58] sm:$0xff]
    %v55 = vld [vmem:[#allocation5 + $0x60] sm:$0xff]
    %v56 = vld [vmem:[#allocation5 + $0x68] sm:$0xff]
    %v57 = vld [vmem:[#allocation5 + $0x70] sm:$0xff]
    %v58 = vld [vmem:[#allocation5 + $0x78] sm:$0xff]
    %v59 = vld [vmem:[#allocation5 + $0x80] sm:$0xff]
    %v60 = vld [vmem:[#allocation5 + $0x88] sm:$0xff]
    %v61 = vld [vmem:[#allocation5 + $0x90] sm:$0xff]
    %v62 = vld [vmem:[#allocation5 + $0x98] sm:$0xff]
    %v63 = vld [vmem:[#allocation5 + $0xa0] sm:$0xff]
    %v64 = vld [vmem:[#allocation5 + $0xa8] sm:$0xff]
    %v65 = vld [vmem:[#allocation5 + $0xb0] sm:$0xff]
    %v66 = vld [vmem:[#allocation5 + $0xb8] sm:$0xff]
    %v67 = vld [vmem:[#allocation5 + $0xc0] sm:$0xff]
    %v68 = vld [vmem:[#allocation5 + $0xc8] sm:$0xff]
    %v69 = vld [vmem:[#allocation5 + $0xd0] sm:$0xff]
    %v70 = vld [vmem:[#allocation5 + $0xd8] sm:$0xff]
    %v71 = vld [vmem:[#allocation5 + $0xe0] sm:$0xff]
    %v72 = vld [vmem:[#allocation5 + $0xe8] sm:$0xff]
    %v73 = vld [vmem:[#allocation5 + $0xf0] sm:$0xff]
    %v74 = vld [vmem:[#allocation5 + $0xf8] sm:$0xff]
    %v75 = vld [vmem:[#allocation5 + $0x100] sm:$0xff]
    %v76 = vld [vmem:[#allocation5 + $0x108] sm:$0xff]
    %v77 = vld [vmem:[#allocation5 + $0x110] sm:$0x1]
    %v78 = vld [vmem:[#allocation5 + $0x111] sm:$0x1]
    %v79 = vld [vmem:[#allocation5 + $0x112] sm:$0x1]
    %v80 = vadd.f32 %v77, %v78
    %v81 = vperm.slane %v80, 0
    %vm82 = vcmask 130048
    %v84 = vsel %vm82, %v42, 0
    %86 = vmatpush.msra.mxu0 0.0
    %87 = vmatpush.msra.mxu0 0.0
    %88 = vmatpush.msra.mxu0 0.0
    %89 = vmatpush.msra.mxu0 0.0
    %90 = vmatpush.msra.mxu0 0.0
    %91 = vmatpush.msra.mxu0 0.0
    %92 = vmatpush.msra.mxu0 0.0
    %93 = vmatpush.msra.mxu0 0.0
    %94 = vmatpush.msra.mxu0 0.0
    %95 = vmatpush.msra.mxu0 0.0
    %96 = vmatpush.msra.mxu0 0.0
    %97 = vmatpush.msra.mxu0 0.0
    %98 = vmatpush.msra.mxu0 0.0
    %99 = vmatpush.msra.mxu0 0.0
    %100 = vmatpush.msra.mxu0 %v44
    %101 = vmatpush.msra.mxu0 %v43
    %102 = vmatmul.f32.gmra.mxu0 %v84
    %v103 = vpop.f32.mrf.mxu0
    %v104 = vadd.f32 %v81, %v103
    %105 = vdwg.mxu0
    %106 = vmatpush.msra.mxu0 %v60
    %107 = vmatpush.msra.mxu0 %v59
    %108 = vmatpush.msra.mxu0 %v58
    %109 = vmatpush.msra.mxu0 %v57
    %110 = vmatpush.msra.mxu0 %v56
    %111 = vmatpush.msra.mxu0 %v55
    %112 = vmatpush.msra.mxu0 %v54
    %113 = vmatpush.msra.mxu0 %v53
    %114 = vmatpush.msra.mxu0 %v52
    %115 = vmatpush.msra.mxu0 %v51
    %116 = vmatpush.msra.mxu0 %v50
    %117 = vmatpush.msra.mxu0 %v49
    %118 = vmatpush.msra.mxu0 %v48
    %119 = vmatpush.msra.mxu0 %v47
    %120 = vmatpush.msra.mxu0 %v46
    %121 = vmatpush.msra.mxu0 %v45
    %122 = vmatmul.f32.gmra.mxu0 0.0
    %v123 = vpop.f32.mrf.mxu0
    %v124 = vadd.f32 0.0, %v123
    %125 = vdwg.mxu0
    %v126 = vadd.f32 %v104, %v124
    %v127 = vtanh.pop %v126
    %128 = vmatpush.msra.mxu0 %v60
    %129 = vmatpush.msra.mxu0 %v59
    %130 = vmatpush.msra.mxu0 %v58
    %131 = vmatpush.msra.mxu0 %v57
    %132 = vmatpush.msra.mxu0 %v56
    %133 = vmatpush.msra.mxu0 %v55
    %134 = vmatpush.msra.mxu0 %v54
    %135 = vmatpush.msra.mxu0 %v53
    %136 = vmatpush.msra.mxu0 %v52
    %137 = vmatpush.msra.mxu0 %v51
    %138 = vmatpush.msra.mxu0 %v50
    %139 = vmatpush.msra.mxu0 %v49
    %140 = vmatpush.msra.mxu0 %v48
    %141 = vmatpush.msra.mxu0 %v47
    %142 = vmatpush.msra.mxu0 %v46
    %143 = vmatpush.msra.mxu0 %v45
    %144 = vmatmul.f32.gmra.mxu0 %v127
    %v145 = vpop.f32.mrf.mxu0
    %v146 = vadd.f32 0.0, %v145
    %147 = vdwg.mxu0
    %v148 = vadd.f32 %v104, %v146
    %v149 = vtanh.pop %v148
    %150 = vmatpush.msra.mxu0 %v60
    %151 = vmatpush.msra.mxu0 %v59
    %152 = vmatpush.msra.mxu0 %v58
    %153 = vmatpush.msra.mxu0 %v57
    %154 = vmatpush.msra.mxu0 %v56
    %155 = vmatpush.msra.mxu0 %v55
    %156 = vmatpush.msra.mxu0 %v54
    %157 = vmatpush.msra.mxu0 %v53
    %158 = vmatpush.msra.mxu0 %v52
    %159 = vmatpush.msra.mxu0 %v51
    %160 = vmatpush.msra.mxu0 %v50
    %161 = vmatpush.msra.mxu0 %v49
    %162 = vmatpush.msra.mxu0 %v48
    %163 = vmatpush.msra.mxu0 %v47
    %164 = vmatpush.msra.mxu0 %v46
    %165 = vmatpush.msra.mxu0 %v45
    %166 = vmatmul.f32.gmra.mxu0 %v149
    %v167 = vpop.f32.mrf.mxu0
    %v168 = vadd.f32 0.0, %v167
    %169 = vdwg.mxu0
    %v170 = vadd.f32 %v104, %v168
    %v171 = vtanh.pop %v170
    %172 = vmatpush.msra.mxu0 %v60
    %173 = vmatpush.msra.mxu0 %v59
    %174 = vmatpush.msra.mxu0 %v58
    %175 = vmatpush.msra.mxu0 %v57
    %176 = vmatpush.msra.mxu0 %v56
    %177 = vmatpush.msra.mxu0 %v55
    %178 = vmatpush.msra.mxu0 %v54
    %179 = vmatpush.msra.mxu0 %v53
    %180 = vmatpush.msra.mxu0 %v52
    %181 = vmatpush.msra.mxu0 %v51
    %182 = vmatpush.msra.mxu0 %v50
    %183 = vmatpush.msra.mxu0 %v49
    %184 = vmatpush.msra.mxu0 %v48
    %185 = vmatpush.msra.mxu0 %v47
    %186 = vmatpush.msra.mxu0 %v46
    %187 = vmatpush.msra.mxu0 %v45
    %188 = vmatmul.f32.gmra.mxu0 %v171
    %v189 = vpop.f32.mrf.mxu0
    %v190 = vadd.f32 0.0, %v189
    %191 = vdwg.mxu0
    %v192 = vadd.f32 %v104, %v190
    %v193 = vtanh.pop %v192
    %194 = vmatpush.msra.mxu0 %v60
    %195 = vmatpush.msra.mxu0 %v59
    %196 = vmatpush.msra.mxu0 %v58
    %197 = vmatpush.msra.mxu0 %v57
    %198 = vmatpush.msra.mxu0 %v56
    %199 = vmatpush.msra.mxu0 %v55
    %200 = vmatpush.msra.mxu0 %v54
    %201 = vmatpush.msra.mxu0 %v53
    %202 = vmatpush.msra.mxu0 %v52
    %203 = vmatpush.msra.mxu0 %v51
    %204 = vmatpush.msra.mxu0 %v50
    %205 = vmatpush.msra.mxu0 %v49
    %206 = vmatpush.msra.mxu0 %v48
    %207 = vmatpush.msra.mxu0 %v47
    %208 = vmatpush.msra.mxu0 %v46
    %209 = vmatpush.msra.mxu0 %v45
    %210 = vmatmul.f32.gmra.mxu0 %v193
    %v211 = vpop.f32.mrf.mxu0
    %v212 = vadd.f32 0.0, %v211
    %213 = vdwg.mxu0
    %v214 = vadd.f32 %v104, %v212
    %v215 = vtanh.pop %v214
    %216 = vmatpush.msra.mxu0 %v60
    %217 = vmatpush.msra.mxu0 %v59
    %218 = vmatpush.msra.mxu0 %v58
    %219 = vmatpush.msra.mxu0 %v57
    %220 = vmatpush.msra.mxu0 %v56
    %221 = vmatpush.msra.mxu0 %v55
    %222 = vmatpush.msra.mxu0 %v54
    %223 = vmatpush.msra.mxu0 %v53
    %224 = vmatpush.msra.mxu0 %v52
    %225 = vmatpush.msra.mxu0 %v51
    %226 = vmatpush.msra.mxu0 %v50
    %227 = vmatpush.msra.mxu0 %v49
    %228 = vmatpush.msra.mxu0 %v48
    %229 = vmatpush.msra.mxu0 %v47
    %230 = vmatpush.msra.mxu0 %v46
    %231 = vmatpush.msra.mxu0 %v45
    %232 = vmatmul.f32.gmra.mxu0 %v215
    %v233 = vpop.f32.mrf.mxu0
    %v234 = vadd.f32 0.0, %v233
    %235 = vdwg.mxu0
    %v236 = vadd.f32 %v104, %v234
    %v237 = vtanh.pop %v236
    %238 = vmatpush.msra.mxu0 %v60
    %239 = vmatpush.msra.mxu0 %v59
    %240 = vmatpush.msra.mxu0 %v58
    %241 = vmatpush.msra.mxu0 %v57
    %242 = vmatpush.msra.mxu0 %v56
    %243 = vmatpush.msra.mxu0 %v55
    %244 = vmatpush.msra.mxu0 %v54
    %245 = vmatpush.msra.mxu0 %v53
    %246 = vmatpush.msra.mxu0 %v52
    %247 = vmatpush.msra.mxu0 %v51
    %248 = vmatpush.msra.mxu0 %v50
    %249 = vmatpush.msra.mxu0 %v49
    %250 = vmatpush.msra.mxu0 %v48
    %251 = vmatpush.msra.mxu0 %v47
    %252 = vmatpush.msra.mxu0 %v46
    %253 = vmatpush.msra.mxu0 %v45
    %254 = vmatmul.f32.gmra.mxu0 %v237
    %v255 = vpop.f32.mrf.mxu0
    %v256 = vadd.f32 0.0, %v255
    %257 = vdwg.mxu0
    %v258 = vadd.f32 %v104, %v256
    %v259 = vtanh.pop %v258
    %260 = vmatpush.msra.mxu0 %v60
    %261 = vmatpush.msra.mxu0 %v59
    %262 = vmatpush.msra.mxu0 %v58
    %263 = vmatpush.msra.mxu0 %v57
    %264 = vmatpush.msra.mxu0 %v56
    %265 = vmatpush.msra.mxu0 %v55
    %266 = vmatpush.msra.mxu0 %v54
    %267 = vmatpush.msra.mxu0 %v53
    %268 = vmatpush.msra.mxu0 %v52
    %269 = vmatpush.msra.mxu0 %v51
    %270 = vmatpush.msra.mxu0 %v50
    %271 = vmatpush.msra.mxu0 %v49
    %272 = vmatpush.msra.mxu0 %v48
    %273 = vmatpush.msra.mxu0 %v47
    %274 = vmatpush.msra.mxu0 %v46
    %275 = vmatpush.msra.mxu0 %v45
    %276 = vmatmul.f32.gmra.mxu0 %v259
    %v277 = vpop.f32.mrf.mxu0
    %v278 = vadd.f32 0.0, %v277
    %279 = vdwg.mxu0
    %v280 = vadd.f32 %v104, %v278
    %v281 = vtanh.pop %v280
    %v282 = vperm.slane %v79, 0
    %283 = vmatpush.msra.mxu0 %v76
    %284 = vmatpush.msra.mxu0 %v75
    %285 = vmatpush.msra.mxu0 %v74
    %286 = vmatpush.msra.mxu0 %v73
    %287 = vmatpush.msra.mxu0 %v72
    %288 = vmatpush.msra.mxu0 %v71
    %289 = vmatpush.msra.mxu0 %v70
    %290 = vmatpush.msra.mxu0 %v69
    %291 = vmatpush.msra.mxu0 %v68
    %292 = vmatpush.msra.mxu0 %v67
    %293 = vmatpush.msra.mxu0 %v66
    %294 = vmatpush.msra.mxu0 %v65
    %295 = vmatpush.msra.mxu0 %v64
    %296 = vmatpush.msra.mxu0 %v63
    %297 = vmatpush.msra.mxu0 %v62
    %298 = vmatpush.msra.mxu0 %v61
    %299 = vmatmul.f32.gmra.mxu0 %v281
    %v300 = vpop.f32.mrf.mxu0
    %v301 = vadd.f32 %v282, %v300
    %302 = vdwg.mxu0
    %303 = vmax.xlane.f32.xlu0 %v301
    %v304 = vpop.xlane.xlu0 %303
    %v305 = vsub.f32 %v301, %v304
    %v306 = vmul.f32 %v305, 1.442695
    %v307 = vpow.pop %v306
    %308 = vadd.xlane.f32.xlu0 %v307
    %v309 = vpop.xlane.xlu0 %308
    %v310 = vrcp.pop %v309
    %v311 = vmul.f32 %v309, %v310
    %v312 = vsub.f32 2.0, %v311
    %v313 = vmul.f32 %v310, %v312
    %v314 = vmul.f32 %v307, %v313
    %315 = vst [vmem:[#allocation7] sm:$0xff] %v314
    // Predicated region
    $region18: #{vanilla_rnn_forward.1} parent=1 // pred_check
      _
    $region19: #{vanilla_rnn_forward.1} parent=1 // pred_check_branch
      %317 = sbr.rel (0) target = $region21
    $region20: #{vanilla_rnn_forward.1} parent=1 // pred_region
      %319 = vsyncadd [#allocation4], 0
      %s321 = sshll.u32 [#allocation7], 4
      %s322 = int_to_ptr.vmem [resolvable:$true] %s321
      %s323 = sshll.u32 %s2, 4
      %s324 = int_to_ptr.hbm [resolvable:$true] %s323
      %326 = dma.vmem_to_hbm [thread:$0]  %s322, 128, %s324, [#allocation4]
    $region21: #{vanilla_rnn_forward.1} parent=1 // pred_fallthru
      _
    // Predicated region
    $region22: #{vanilla_rnn_forward.1} parent=1 // pred_check
      _
    $region23: #{vanilla_rnn_forward.1} parent=1 // pred_check_branch
      %328 = sbr.rel (0) target = $region25
    $region24: #{vanilla_rnn_forward.1} parent=1 // pred_region
      %330 = dma.done [#allocation4], 128
    $region25: #{vanilla_rnn_forward.1} parent=1 // pred_fallthru
      _
    %331 = vsyncpa [#allocation3], 1
    %332 = vsyncpa [#allocation6], 1
    %333 = vsyncpa [#allocation4], 1

</llo_original>
